<compile_context>
chip_gen: v7x
topology: tpu7x:2x2x1
jax: 0.10.0
libtpu: 0.0.40
codegen_flags: <defaults>
</compile_context>

<pallas_src>
import math

import jax
import jax.numpy as jnp
from jax.experimental import pallas as pl
from jax.experimental.pallas import tpu as pltpu


# ----------------------------------------------------------------------------
# Pallas kernels: the matmul hot path (lora_B @ lora_A), one output tile each
# ----------------------------------------------------------------------------
def _lora_matmul_kernel(b_ref, a_ref, o_ref):
    # b_ref: (TM, r), a_ref: (r, TN), o_ref: (TM, TN).  Dropout with p=0 is
    # the identity, so lora_A is used as-is.
    # TODO(synk): training-time DropoutTensor (p > 0) masking of lora_A is not
    # implemented; eval / p=0 semantics only.
    o_ref[...] = jnp.dot(
        b_ref[...], a_ref[...], preferred_element_type=jnp.float32
    ).astype(o_ref.dtype)


def _lora_matmul_add_kernel(b_ref, a_ref, base_ref, o_ref):
    # Fused "base + lora_B @ lora_A": saves an entire extra HBM pass that a
    # separate XLA add would cost on this writeback-bound problem.
    acc = jnp.dot(b_ref[...], a_ref[...], preferred_element_type=jnp.float32)
    o_ref[...] = (base_ref[...].astype(jnp.float32) + acc).astype(o_ref.dtype)


# ----------------------------------------------------------------------------
# Generation-aware configuration helpers
# ----------------------------------------------------------------------------
def _vmem_capacity_bytes():
    """Physical VMEM of the local chip; conservative 64 MiB (v7x) fallback."""
    try:
        return int(pltpu.get_tpu_info().vmem_capacity_bytes)
    except Exception:
        return 64 * 1024 * 1024


def _default_tile_caps(vmem_cap_bytes):
    """Big tiles on 128-MiB parts (v5e/v6e); tighter on 64-MiB v7x per-TC VMEM."""
    if vmem_cap_bytes >= 100 * 1024 * 1024:
        return 1024, 4096   # out tile 16 MiB f32 -> ~33 MiB double-buffered
    return 512, 2048        # out tile  4 MiB f32 -> ~ 9 MiB double-buffered


def _pick_tile(dim, cap, quantum):
    """Full-dim block for small dims; otherwise the largest quantum-multiple
    <= cap that divides dim (no ragged masked edge tile); else the cap."""
    if dim <= cap:
        return dim  # block == full array dim: always layout-legal
    cap = (cap // quantum) * quantum
    for t in range(cap, quantum - 1, -quantum):
        if dim % t == 0:
            return t
    return cap  # edge blocks (cdiv grid) are masked by Pallas


def _vmem_limit_bytes(vmem_cap, tm, tn, r, a_isz, b_isz, o_isz, base_isz):
    """Double-buffered working set + headroom, clamped to 3/4 of physical VMEM."""
    work = 2 * (tm * tn * o_isz + r * tn * a_isz + tm * r * b_isz)
    if base_isz:
        work += 2 * tm * tn * base_isz
    limit = work + (8 << 20)             # headroom: compiler scratch, semaphores
    limit = min(limit, (vmem_cap * 3) // 4)
    limit = max(limit, 16 << 20)
    return int(limit)


def _dimension_semantics_candidates():
    """Preferred dimension_semantics per generation, with a safe fallback.

    On v7x only CORE_PARALLEL actually shards the grid across the 2
    TensorCores (the plain "parallel" hint is a measured near no-op), which
    matters because the kernel is HBM-writeback bound and v7x bandwidth is
    per-TC.  On single-TC parts we keep ("parallel", "parallel")."""
    kind = ""
    try:
        kind = jax.devices()[0].device_kind.lower()
    except Exception:
        pass
    cands = []
    core_parallel = getattr(pltpu, "CORE_PARALLEL", None)
    parallel = getattr(pltpu, "PARALLEL", "parallel")
    if "7" in kind and core_parallel is not None:
        cands.append((core_parallel, parallel))
    cands.append(("parallel", "parallel"))
    return cands


# ----------------------------------------------------------------------------
# Pallas-backed matmul (multi-tile path)
# ----------------------------------------------------------------------------
def _lora_pallas_matmul(lora_B, lora_A, base, out_dtype, tm, tn, grid,
                        vmem_cap, donate_base):
    d1_eff, r = lora_B.shape
    d2_eff = lora_A.shape[1]
    o_isz = jnp.dtype(out_dtype).itemsize
    fused = base is not None

    in_specs = [
        # lora_B tile: constant across the inner (j) loop -> stays in VMEM.
        pl.BlockSpec((tm, r), lambda i, j: (i, 0)),
        # lora_A tile: r x TN per step (tiny traffic vs. output writeback).
        pl.BlockSpec((r, tn), lambda i, j: (0, j)),
    ]
    args = [lora_B, lora_A]
    if fused:
        in_specs.append(pl.BlockSpec((tm, tn), lambda i, j: (i, j)))
        args.append(base)
    out_spec = pl.BlockSpec((tm, tn), lambda i, j: (i, j))

    kernel = _lora_matmul_add_kernel if fused else _lora_matmul_kernel

    bytes_accessed = (
        lora_B.size * lora_B.dtype.itemsize
        + grid[0] * lora_A.size * lora_A.dtype.itemsize  # A re-read once per i
        + d1_eff * d2_eff * o_isz
    )
    flops = 2 * d1_eff * d2_eff * r
    if fused:
        bytes_accessed += base.size * base.dtype.itemsize
        flops += d1_eff * d2_eff
    cost = pl.CostEstimate(flops=flops, transcendentals=0,
                           bytes_accessed=bytes_accessed)

    vmem_limit = _vmem_limit_bytes(
        vmem_cap, tm, tn, r,
        lora_A.dtype.itemsize, lora_B.dtype.itemsize, o_isz,
        base.dtype.itemsize if fused else 0)

    # Optional in-place update of the base operand (W += B @ A pattern).
    io_aliases = {2: 0} if (fused and donate_base) else {}

    last_err = None
    for sems in _dimension_semantics_candidates():
        try:
            return pl.pallas_call(
                kernel,
                out_shape=jax.ShapeDtypeStruct((d1_eff, d2_eff), out_dtype),
                grid_spec=pl.GridSpec(grid=grid, in_specs=in_specs,
                                      out_specs=out_spec),
                compiler_params=pltpu.CompilerParams(
                    dimension_semantics=sems,
                    vmem_limit_bytes=vmem_limit,
                ),
                cost_estimate=cost,
                input_output_aliases=io_aliases,
            )(*args)
        except Exception as e:  # fall back to the next semantics variant
            last_err = e
    raise last_err


# ----------------------------------------------------------------------------
# Public wrapper: LoraParam.forward equivalent
# ----------------------------------------------------------------------------
def lora_param_forward(lora_B, lora_A, ratio=None, *, base=None,
                       out_dtype=None, tm_cap=None, tn_cap=None,
                       donate_base=False):
    """out = (base +) lora_B @ lora_A, plus the optional ratio reshape.

    out_dtype: pass jnp.bfloat16 when the consumer tolerates it — halves HBM
    writeback (the bottleneck); MXU accumulation stays f32 regardless.
    base: optional residual of the same (logical) shape as the output; fused
    into the kernel so the add doesn't cost another full HBM pass.
    """
    d1_eff, r = lora_B.shape
    r2, d2_eff = lora_A.shape
    assert r == r2, (lora_B.shape, lora_A.shape)

    if out_dtype is None:
        dts = [lora_B.dtype, lora_A.dtype]
        if base is not None:
            dts.append(base.dtype)
        out_dtype = jnp.result_type(*dts)
    out_dtype = jnp.dtype(out_dtype)

    # Bring base into the effective (pre-ratio-reshape) layout; this reshape
    # is contiguous and metadata-only.
    base_eff = None
    if base is not None:
        assert base.size == d1_eff * d2_eff, (base.shape, (d1_eff, d2_eff))
        base_eff = base.reshape(d1_eff, d2_eff)

    vmem_cap = _vmem_capacity_bytes()
    dflt_tm, dflt_tn = _default_tile_caps(vmem_cap)
    tm_cap = dflt_tm if tm_cap is None else tm_cap
    tn_cap = dflt_tn if tn_cap is None else tn_cap

    tm = _pick_tile(d1_eff, tm_cap, 8)
    tn = _pick_tile(d2_eff, tn_cap, 128)
    grid = (pl.cdiv(d1_eff, tm), pl.cdiv(d2_eff, tn))  # j (N) innermost

    if grid == (1, 1):
        # Small-shape fast path: pallas_call launch + pipeline prologue would
        # dominate; let XLA fuse the tiny matmul with its neighbours instead.
        out = jnp.dot(lora_B, lora_A, preferred_element_type=jnp.float32)
        if base_eff is not None:
            out = out + base_eff.astype(jnp.float32)
        out = out.astype(out_dtype)
    else:
        out = _lora_pallas_matmul(lora_B, lora_A, base_eff, out_dtype,
                                  tm, tn, grid, vmem_cap, donate_base)

    if ratio is not None:
        d1o, d2o = out.shape
        out = out.reshape(d1o * ratio, d2o // ratio)
    return out


# ----------------------------------------------------------------------------
# Deterministic parameter construction (mirrors LoraParam.__init__ shapes)
# ----------------------------------------------------------------------------
def make_lora_params(key, d1, d2, r, ratio, dtype=jnp.float32):
    if ratio is not None:
        assert d1 % ratio == 0
        d1_eff = d1 // ratio
        d2_eff = d2 * ratio
    else:
        d1_eff, d2_eff = d1, d2

    k_a, k_b = jax.random.split(key)

    # kaiming_uniform_(a=sqrt(5)) on a (r, d2_eff) tensor -> U(-bound, bound)
    # with bound = 1 / sqrt(fan_in) = 1 / sqrt(d2_eff).
    bound_a = 1.0 / math.sqrt(d2_eff)
    lora_A = jax.random.uniform(
        k_a, (r, d2_eff), dtype=dtype, minval=-bound_a, maxval=bound_a
    )

    # NOTE: the PyTorch module initializes lora_B to zeros (out == 0 at init).
    # Small deterministic random values are used instead so the kernel result
    # is numerically non-trivial to check.
    lora_B = 0.02 * jax.random.normal(k_b, (d1_eff, r), dtype=dtype)

    return lora_A, lora_B


if __name__ == "__main__":
    # Case 1: tiny shapes with ratio reshape -> grid (1,1) fast path.
    d1, d2, r, ratio = 32, 64, 8, 2  # effective: lora_B (16, 8), lora_A (8, 128)
    lora_A1, lora_B1 = make_lora_params(jax.random.PRNGKey(0), d1, d2, r, ratio)
    out1 = jax.block_until_ready(lora_param_forward(lora_B1, lora_A1, ratio=ratio))
    ref1 = (lora_B1 @ lora_A1).reshape(d1, d2)
    assert out1.shape == (d1, d2), out1.shape
    assert jnp.allclose(out1, ref1, atol=1e-5, rtol=1e-5)

    # Case 2: multi-tile 2-D grid through the Pallas kernel (f32 output).
    # Small tile caps force several (i, j) blocks.
    d1b, d2b, rb = 256, 512, 8
    lora_A2, lora_B2 = make_lora_params(jax.random.PRNGKey(1), d1b, d2b, rb, None)
    out2 = jax.block_until_ready(
        lora_param_forward(lora_B2, lora_A2, tm_cap=128, tn_cap=256)
    )
    ref2 = lora_B2 @ lora_A2
    assert out2.shape == (d1b, d2b), out2.shape
    assert jnp.allclose(out2, ref2, atol=1e-4, rtol=1e-4)

    # Case 3: bf16 output (halves the HBM writeback); accumulation stays f32.
    out3 = jax.block_until_ready(
        lora_param_forward(lora_B2, lora_A2, out_dtype=jnp.bfloat16,
                           tm_cap=128, tn_cap=256)
    )
    assert out3.dtype == jnp.bfloat16, out3.dtype
    assert jnp.allclose(out3.astype(jnp.float32), ref2, atol=1e-3, rtol=2e-2)

    # Case 4: fused residual add (base + lora_B @ lora_A) in a single pass.
    base = jax.random.normal(jax.random.PRNGKey(2), (d1b, d2b), dtype=jnp.float32)
    out4 = jax.block_until_ready(
        lora_param_forward(lora_B2, lora_A2, base=base, tm_cap=128, tn_cap=256)
    )
    ref4 = base + ref2
    assert jnp.allclose(out4, ref4, atol=1e-4, rtol=1e-4)

    print("KERNEL_OK")
</pallas_src>

<mosaic_0001>
module attributes {stable_mosaic.version = 11 : i64} {
  func.func @_lora_matmul_kernel(%arg0: i32, %arg1: i32, %arg2: memref<128x8xf32, #tpu.memory_space<vmem>>, %arg3: memref<8x256xf32, #tpu.memory_space<vmem>>, %arg4: memref<128x256xf32, #tpu.memory_space<vmem>>) attributes {dimension_semantics = [#tpu.dimension_semantics<parallel>, #tpu.dimension_semantics<parallel>], iteration_bounds = array<i64: 2, 2>, scalar_prefetch = 0 : i64, scratch_operands = 0 : i64, tpu.core_type = #tpu.core_type<tc>, window_params = [{transform_indices = @transform_0, window_bounds = array<i64: 128, 8>}, {transform_indices = @transform_1, window_bounds = array<i64: 8, 256>}, {transform_indices = @transform_2, window_bounds = array<i64: 128, 256>}]} {
    %c0 = arith.constant 0 : index
    %c0_0 = arith.constant 0 : index
    %0 = vector.load %arg2[%c0, %c0_0] : memref<128x8xf32, #tpu.memory_space<vmem>>, vector<128x8xf32>
    %c0_1 = arith.constant 0 : index
    %c0_2 = arith.constant 0 : index
    %1 = vector.load %arg3[%c0_1, %c0_2] : memref<8x256xf32, #tpu.memory_space<vmem>>, vector<8x256xf32>
    %cst = arith.constant dense<0.000000e+00> : vector<128x256xf32>
    %2 = tpu.matmul %0, %1, %cst {dimension_numbers = #tpu.dot_dimension_numbers<[1], [0], [0], [1], [0, 0, 1, 1], [], []>} : vector<128x8xf32>, vector<8x256xf32>, vector<128x256xf32> -> vector<128x256xf32>
    %c0_3 = arith.constant 0 : index
    %c0_4 = arith.constant 0 : index
    %3 = vector.load %arg4[%c0_3, %c0_4] : memref<128x256xf32, #tpu.memory_space<vmem>>, vector<128x256xf32>
    tpu.vector_store %arg4[%c0_3, %c0_4], %2 {strides = array<i32>} : memref<128x256xf32, #tpu.memory_space<vmem>>, vector<128x256xf32>,
    return
  }
  func.func @transform_0(%arg0: i32, %arg1: i32) -> (i32, i32) {
    %c0_i32 = arith.constant 0 : i32
    %c0_i32_0 = arith.constant 0 : i32
    return %arg0, %c0_i32 : i32, i32
  }
  func.func @transform_1(%arg0: i32, %arg1: i32) -> (i32, i32) {
    %c0_i32 = arith.constant 0 : i32
    %c0_i32_0 = arith.constant 0 : i32
    return %c0_i32, %arg1 : i32, i32
  }
  func.func @transform_2(%arg0: i32, %arg1: i32) -> (i32, i32) {
    %c0_i32 = arith.constant 0 : i32
    return %arg0, %arg1 : i32, i32
  }
}

</mosaic_0001>

<llo_original>
// kernel: tpu_custom_call.1
$region0: #{tpu_custom_call.1}
  #allocation0 [shape = 'u32[]', space=smem, size = 0x4, offset = 0x4, fixed_abs, tag = 'smem constant byte address 0x4 - core index']
  #allocation1 [shape = 'u32[144,128]{1,0:T(1,128)}', space=vmem, size = 0x12000, scoped, tag = 'internal scratch']
  %s0 = inlined_call_operand.vmem [shape: f32[256,8], index: 0, kind: input, shape index: {}]
  %s1 = inlined_call_operand.vmem [shape: f32[8,512], index: 1, kind: input, shape index: {}]
  %s2 = inlined_call_operand.hbm [shape: f32[256,512], index: 2, kind: output, shape index: {}]
  %s3 = sld [smem:[#allocation0]]
  $region41: #{tpu_custom_call.1} parent=0
    _
  %s5 = ssub.s32 1, %s3
  %s6 = scalar_select 0, %s5, %s3
  $region1: #{tpu_custom_call.1} parent=0
    #allocation2 [shape = 'u8[262144]{0}', space=vmem, size = 0x40000, scoped, tag = 'output window, operand 0']
    #allocation3 [shape = 's32[2]{0}', space=sflag, size = 0x8, scoped, tag = 'scoped memory for tpu_custom_call.1']
    %7 = vsyncpa [#allocation3], 0
    %s8 = scalar_lea.sflag [#allocation3], 1
    %9 = vsyncpa %s8, 0
    loop: start=0, step=1, limit=6
    $region2: #{tpu_custom_call.1} parent=1 // loop_pre_header
      _
    $region3: #{tpu_custom_call.1} parent=1 // loop_header
      %s11 = sphi 0, %s15
      %p12 = scmp.ge.s32.totalorder %s11, 6
      %s18 = sphi 0, %s30
      %s19 = sphi 0, %s26
      %s20 = sphi 0, %s18
      %s21 = sphi 0, %s19
      %s22 = sphi 0, %s20
      %s23 = sphi 0, %s21
      %s33 = sphi 0, %s35
      %s36 = sphi 0, %s33
      %s37 = sphi 0, %s36
      %s53 = sphi 0, %s37
      %s59 = sphi 0, %s61
      %s62 = sphi 0, %s59
      %s63 = sphi 0, %s62
      %s79 = sphi 0, %s63
      %s87 = sphi 0, %s89
      %s90 = sphi 0, %s87
      %s91 = sphi 0, %s90
      %s107 = sphi 0, %s91
    $region4: #{tpu_custom_call.1} parent=1 // loop_header_branch
      %14 = sbr.rel (%p12) target = $region8
    $region5: #{tpu_custom_call.1} parent=1 // loop_body
      %s16 = ssub.s32 %s11, 1
      %s17 = ssub.s32 %s11, 2
      %s24 = sadd.s32 1, %s19
      %p25 = scmp.ge.s32.totalorder %s24, 2
      %s26 = scalar_select %p25, 0, %s24
      %s27 = sadd.s32 1, %s18
      %s28 = scalar_select %p25, %s27, %s18
      %p29 = scmp.ge.s32.totalorder %s28, 2
      %s30 = scalar_select %p29, 0, %s28
      %s31 = ssub.s32 %s18, %s30
      %p32 = scmp.eq.s32.totalorder %s31, 0
      %s34 = sadd.s32 %s33, 1
      %s35 = scalar_select %p32, %s33, %s34
      %p38 = pneg %p32
      %p39 = scmp.eq.s32.totalorder %s11, 3
      %p40 = por %p38, %p39
      %p41 = scmp.ne.s32.totalorder %s33, %s36
      %p42 = scmp.eq.s32.totalorder %s11, 0
      %p43 = por %p41, %p42
      %p44 = scmp.ne.s32.totalorder %s33, %s36
      %p45 = scmp.eq.s32.totalorder %s16, 3
      %p46 = por %p44, %p45
      %p47 = scmp.ne.s32.totalorder %s36, %s37
      %p48 = scmp.eq.s32.totalorder %s16, 0
      %p49 = por %p47, %p48
      %p50 = scmp.ne.s32.totalorder %s36, %s37
      %p51 = scmp.eq.s32.totalorder %s17, 3
      %p52 = por %p50, %p51
      %p54 = scmp.ne.s32.totalorder %s37, %s53
      %p55 = scmp.eq.s32.totalorder %s17, 0
      %p56 = por %p54, %p55
      %s57 = ssub.s32 %s19, %s26
      %p58 = scmp.eq.s32.totalorder %s57, 0
      %s60 = sadd.s32 %s59, 1
      %s61 = scalar_select %p58, %s59, %s60
      %p64 = pneg %p58
      %p65 = scmp.eq.s32.totalorder %s11, 3
      %p66 = por %p64, %p65
      %p67 = scmp.ne.s32.totalorder %s59, %s62
      %p68 = scmp.eq.s32.totalorder %s11, 0
      %p69 = por %p67, %p68
      %p70 = scmp.ne.s32.totalorder %s59, %s62
      %p71 = scmp.eq.s32.totalorder %s16, 3
      %p72 = por %p70, %p71
      %p73 = scmp.ne.s32.totalorder %s62, %s63
      %p74 = scmp.eq.s32.totalorder %s16, 0
      %p75 = por %p73, %p74
      %p76 = scmp.ne.s32.totalorder %s62, %s63
      %p77 = scmp.eq.s32.totalorder %s17, 3
      %p78 = por %p76, %p77
      %p80 = scmp.ne.s32.totalorder %s63, %s79
      %p81 = scmp.eq.s32.totalorder %s17, 0
      %p82 = por %p80, %p81
      %s83 = ssub.s32 %s18, %s30
      %s84 = ssub.s32 %s19, %s26
      %s85 = sor.u32 %s83, %s84
      %p86 = scmp.eq.s32.totalorder %s85, 0
      %s88 = sadd.s32 %s87, 1
      %s89 = scalar_select %p86, %s87, %s88
      %p92 = pneg %p86
      %p93 = scmp.eq.s32.totalorder %s11, 3
      %p94 = por %p92, %p93
      %p95 = scmp.ne.s32.totalorder %s87, %s90
      %p96 = scmp.eq.s32.totalorder %s11, 0
      %p97 = por %p95, %p96
      %p98 = scmp.ne.s32.totalorder %s87, %s90
      %p99 = scmp.eq.s32.totalorder %s16, 3
      %p100 = por %p98, %p99
      %p101 = scmp.ne.s32.totalorder %s90, %s91
      %p102 = scmp.eq.s32.totalorder %s16, 0
      %p103 = por %p101, %p102
      %p104 = scmp.ne.s32.totalorder %s90, %s91
      %p105 = scmp.eq.s32.totalorder %s17, 3
      %p106 = por %p104, %p105
      %p108 = scmp.ne.s32.totalorder %s91, %s107
      %p109 = scmp.eq.s32.totalorder %s17, 0
      %p110 = por %p108, %p109
      %p111 = scmp.le.s32.totalorder 1, %s11
      %p112 = scmp.lt.s32.totalorder %s11, 5
      %p113 = pnand %p111, %p112
      %p114 = pneg %p113
      // Predicated region
      $region9: #{tpu_custom_call.1} parent=5 // pred_check
        _
      $region10: #{tpu_custom_call.1} parent=5 // pred_check_branch
        %116 = sbr.rel (%p113) target = $region12
      $region11: #{tpu_custom_call.1} parent=5 // pred_region
        %s117 = ssub.s32 %s11, 1
      $region12: #{tpu_custom_call.1} parent=5 // pred_fallthru
        _
      %p118 = scmp.lt.s32.totalorder %s11, 4
      // Predicated region
      $region13: #{tpu_custom_call.1} parent=5 // pred_check
        %p119 = pneg %p118
      $region14: #{tpu_custom_call.1} parent=5 // pred_check_branch
        %121 = sbr.rel (%p119) target = $region16
      $region15: #{tpu_custom_call.1} parent=5 // pred_region
        // Predicated region
        $region17: #{tpu_custom_call.1} parent=15 // pred_check
          %p122 = pneg %p43
        $region18: #{tpu_custom_call.1} parent=15 // pred_check_branch
          %124 = sbr.rel (%p122) target = $region20
        $region19: #{tpu_custom_call.1} parent=15 // pred_region
          %s125 = smul.u32 16, %s18
          %p126 = scmp.lt.s32.totalorder %s125, 31
          %s127 = scalar_select %p126, %s125, 31
          %s128 = smul.addr %s127, 8
          %s129 = scalar_lea.vmem %s0, %s128
          %s130 = smul.u32 16, %s18
        $region20: #{tpu_custom_call.1} parent=15 // pred_fallthru
          _
        // Predicated region
        $region21: #{tpu_custom_call.1} parent=15 // pred_check
          %p131 = pneg %p69
        $region22: #{tpu_custom_call.1} parent=15 // pred_check_branch
          %133 = sbr.rel (%p131) target = $region24
        $region23: #{tpu_custom_call.1} parent=15 // pred_region
          %s134 = smul.u32 2, %s19
          %p135 = scmp.lt.s32.totalorder %s134, 3
          %s136 = scalar_select %p135, %s134, 3
          %s137 = smul.addr %s136, 8
          %s138 = scalar_lea.vmem %s1, %s137
          %s139 = smul.u32 2, %s19
        $region24: #{tpu_custom_call.1} parent=15 // pred_fallthru
          _
      $region16: #{tpu_custom_call.1} parent=5 // pred_fallthru
        _
      %p140 = scmp.le.s32.totalorder 1, %s11
      %p141 = scmp.lt.s32.totalorder %s11, 5
      %p142 = pnand %p140, %p141
      %p143 = pneg %p142
      // Predicated region
      $region25: #{tpu_custom_call.1} parent=5 // pred_check
        _
      $region26: #{tpu_custom_call.1} parent=5 // pred_check_branch
        %145 = sbr.rel (%p142) target = $region28
      $region27: #{tpu_custom_call.1} parent=5 // pred_region
        %s146 = ssub.s32 %s11, 1
        %s147 = smul.u32 16, %s20
        %p148 = scmp.lt.s32.totalorder %s147, 31
        %s149 = scalar_select %p148, %s147, 31
        %s150 = smul.addr %s149, 8
        %s151 = scalar_lea.vmem %s0, %s150
        %p152 = pneg %p49
        %p153 = pneg %p46
        %s154 = smul.u32 2, %s21
        %p155 = scmp.lt.s32.totalorder %s154, 3
        %s156 = scalar_select %p155, %s154, 3
        %s157 = smul.addr %s156, 8
        %s158 = scalar_lea.vmem %s1, %s157
        %p159 = pneg %p75
        %p160 = pneg %p72
        %p161 = pneg %p103
        %p162 = pneg %p100
        %s163 = sand.u32 %s90, 1
        %s164 = scalar_lea.sflag [#allocation3], %s163
        %s165 = sand.u32 %s90, 1
        %s166 = smul.addr %s165, 256
        %s167 = scalar_lea.vmem [#allocation2], %s166
        %s168 = smul.u32 16, %s20
        %p169 = scmp.lt.s32.totalorder %s168, 31
        %s170 = scalar_select %p169, %s168, 31
        %s171 = smul.addr %s170, 8
        %s172 = scalar_lea.vmem %s0, %s171
        %s173 = smul.u32 16, %s20
        %s174 = smul.u32 2, %s21
        %p175 = scmp.lt.s32.totalorder %s174, 3
        %s176 = scalar_select %p175, %s174, 3
        %s177 = smul.addr %s176, 8
        %s178 = scalar_lea.vmem %s1, %s177
        %s179 = smul.u32 2, %s21
        %s180 = smul.u32 16, %s20
        %s181 = smul.u32 2, %s21
        %v182 = vld [vmem:[%s172] sm:$0xff]
        %v183 = vld [vmem:[%s172 + $0x8] sm:$0xff]
        %v184 = vld [vmem:[%s172 + $0x10] sm:$0xff]
        %v185 = vld [vmem:[%s172 + $0x18] sm:$0xff]
        %v186 = vld [vmem:[%s172 + $0x20] sm:$0xff]
        %v187 = vld [vmem:[%s172 + $0x28] sm:$0xff]
        %v188 = vld [vmem:[%s172 + $0x30] sm:$0xff]
        %v189 = vld [vmem:[%s172 + $0x38] sm:$0xff]
        %v190 = vld [vmem:[%s172 + $0x40] sm:$0xff]
        %v191 = vld [vmem:[%s172 + $0x48] sm:$0xff]
        %v192 = vld [vmem:[%s172 + $0x50] sm:$0xff]
        %v193 = vld [vmem:[%s172 + $0x58] sm:$0xff]
        %v194 = vld [vmem:[%s172 + $0x60] sm:$0xff]
        %v195 = vld [vmem:[%s172 + $0x68] sm:$0xff]
        %v196 = vld [vmem:[%s172 + $0x70] sm:$0xff]
        %v197 = vld [vmem:[%s172 + $0x78] sm:$0xff]
        %v198 = vld [vmem:[%s178] sm:$0xff]
        %v199 = vld [vmem:[%s178 + $0x8] sm:$0xff]
        %vm200 = vcmask 64512
        %v202 = vsel %vm200, %v182, 0
        %v205 = vsel %vm200, %v183, 0
        %v208 = vsel %vm200, %v184, 0
        %v211 = vsel %vm200, %v185, 0
        %v214 = vsel %vm200, %v186, 0
        %v217 = vsel %vm200, %v187, 0
        %v220 = vsel %vm200, %v188, 0
        %v223 = vsel %vm200, %v189, 0
        %v226 = vsel %vm200, %v190, 0
        %v229 = vsel %vm200, %v191, 0
        %v232 = vsel %vm200, %v192, 0
        %v235 = vsel %vm200, %v193, 0
        %v238 = vsel %vm200, %v194, 0
        %v241 = vsel %vm200, %v195, 0
        %v244 = vsel %vm200, %v196, 0
        %v247 = vsel %vm200, %v197, 0
        %249 = vmatprep.subr.mxu0 %v199
        %250 = vmatpush1.msra.mxu0 %v198
        %251 = vmatprep.subr.mxu0 0.0
        %252 = vmatpush1.msra.mxu0 0.0
        %253 = vmatprep.subr.mxu0 0.0
        %254 = vmatpush1.msra.mxu0 0.0
        %255 = vmatprep.subr.mxu0 0.0
        %256 = vmatpush1.msra.mxu0 0.0
        %257 = vmatprep.subr.mxu0 0.0
        %258 = vmatpush1.msra.mxu0 0.0
        %259 = vmatprep.subr.mxu0 0.0
        %260 = vmatpush1.msra.mxu0 0.0
        %261 = vmatprep.subr.mxu0 0.0
        %262 = vmatpush1.msra.mxu0 0.0
        %263 = vmatprep.subr.mxu0 0.0
        %264 = vmatpush1.msra.mxu0 0.0
        %265 = vmatprep.subr.mxu0 0.0
        %266 = vmatpush1.msra.mxu0 0.0
        %267 = vmatprep.subr.mxu0 0.0
        %268 = vmatpush1.msra.mxu0 0.0
        %269 = vmatprep.subr.mxu0 0.0
        %270 = vmatpush1.msra.mxu0 0.0
        %271 = vmatprep.subr.mxu0 0.0
        %272 = vmatpush1.msra.mxu0 0.0
        %273 = vmatprep.subr.mxu0 0.0
        %274 = vmatpush1.msra.mxu0 0.0
        %275 = vmatprep.subr.mxu0 0.0
        %276 = vmatpush1.msra.mxu0 0.0
        %277 = vmatprep.subr.mxu0 0.0
        %278 = vmatpush1.msra.mxu0 0.0
        %279 = vmatprep.subr.mxu0 0.0
        %280 = vmatpush1.msra.mxu0 0.0
        %281 = vmatprep.subr.mxu0 0.0
        %282 = vmatpush1.msra.mxu0 0.0
        %283 = vmatprep.subr.mxu0 0.0
        %284 = vmatpush1.msra.mxu0 0.0
        %285 = vmatprep.subr.mxu0 0.0
        %286 = vmatpush1.msra.mxu0 0.0
        %287 = vmatprep.subr.mxu0 0.0
        %288 = vmatpush1.msra.mxu0 0.0
        %289 = vmatprep.subr.mxu0 0.0
        %290 = vmatpush1.msra.mxu0 0.0
        %291 = vmatprep.subr.mxu0 0.0
        %292 = vmatpush1.msra.mxu0 0.0
        %293 = vmatprep.subr.mxu0 0.0
        %294 = vmatpush1.msra.mxu0 0.0
        %295 = vmatprep.subr.mxu0 0.0
        %296 = vmatpush1.msra.mxu0 0.0
        %297 = vmatprep.subr.mxu0 0.0
        %298 = vmatpush1.msra.mxu0 0.0
        %299 = vmatprep.subr.mxu0 0.0
        %300 = vmatpush1.msra.mxu0 0.0
        %301 = vmatprep.subr.mxu0 0.0
        %302 = vmatpush1.msra.mxu0 0.0
        %303 = vmatprep.subr.mxu0 0.0
        %304 = vmatpush1.msra.mxu0 0.0
        %305 = vmatprep.subr.mxu0 0.0
        %306 = vmatpush1.msra.mxu0 0.0
        %307 = vmatprep.subr.mxu0 0.0
        %308 = vmatpush1.msra.mxu0 0.0
        %309 = vmatprep.subr.mxu0 0.0
        %310 = vmatpush1.msra.mxu0 0.0
        %311 = vmatprep.subr.mxu0 0.0
        %312 = vmatpush1.msra.mxu0 0.0
        %313 = vmatprep.mubr.f32.mxu0 0.0
        %314 = vmatmul.mubr.f32.gmra.mrb[0].mxu0 %v202
        %v315 = vpop.f32.mrb[0].mxu0
        %v316 = vadd.f32 0.0, %v315
        %v317 = vpop.f32.mrb[0].mxu0
        %v318 = vadd.f32 0.0, %v317
        %319 = vmatprep.mubr.f32.mxu0 0.0
        %320 = vmatmul.mubr.f32.gmra.mrb[0].mxu0 %v205
        %v321 = vpop.f32.mrb[0].mxu0
        %v322 = vadd.f32 0.0, %v321
        %v323 = vpop.f32.mrb[0].mxu0
        %v324 = vadd.f32 0.0, %v323
        %325 = vmatprep.mubr.f32.mxu0 0.0
        %326 = vmatmul.mubr.f32.gmra.mrb[0].mxu0 %v208
        %v327 = vpop.f32.mrb[0].mxu0
        %v328 = vadd.f32 0.0, %v327
        %v329 = vpop.f32.mrb[0].mxu0
        %v330 = vadd.f32 0.0, %v329
        %331 = vmatprep.mubr.f32.mxu0 0.0
        %332 = vmatmul.mubr.f32.gmra.mrb[0].mxu0 %v211
        %v333 = vpop.f32.mrb[0].mxu0
        %v334 = vadd.f32 0.0, %v333
        %v335 = vpop.f32.mrb[0].mxu0
        %v336 = vadd.f32 0.0, %v335
        %337 = vmatprep.mubr.f32.mxu0 0.0
        %338 = vmatmul.mubr.f32.gmra.mrb[0].mxu0 %v214
        %v339 = vpop.f32.mrb[0].mxu0
        %v340 = vadd.f32 0.0, %v339
        %v341 = vpop.f32.mrb[0].mxu0
        %v342 = vadd.f32 0.0, %v341
        %343 = vmatprep.mubr.f32.mxu0 0.0
        %344 = vmatmul.mubr.f32.gmra.mrb[0].mxu0 %v217
        %v345 = vpop.f32.mrb[0].mxu0
        %v346 = vadd.f32 0.0, %v345
        %v347 = vpop.f32.mrb[0].mxu0
        %v348 = vadd.f32 0.0, %v347
        %349 = vmatprep.mubr.f32.mxu0 0.0
        %350 = vmatmul.mubr.f32.gmra.mrb[0].mxu0 %v220
        %v351 = vpop.f32.mrb[0].mxu0
        %v352 = vadd.f32 0.0, %v351
        %v353 = vpop.f32.mrb[0].mxu0
        %v354 = vadd.f32 0.0, %v353
        %355 = vmatprep.mubr.f32.mxu0 0.0
        %356 = vmatmul.mubr.f32.gmra.mrb[0].mxu0 %v223
        %v357 = vpop.f32.mrb[0].mxu0
        %v358 = vadd.f32 0.0, %v357
        %v359 = vpop.f32.mrb[0].mxu0
        %v360 = vadd.f32 0.0, %v359
        %361 = vmatprep.mubr.f32.mxu0 0.0
        %362 = vmatmul.mubr.f32.gmra.mrb[0].mxu0 %v226
        %v363 = vpop.f32.mrb[0].mxu0
        %v364 = vadd.f32 0.0, %v363
        %v365 = vpop.f32.mrb[0].mxu0
        %v366 = vadd.f32 0.0, %v365
        %367 = vmatprep.mubr.f32.mxu0 0.0
        %368 = vmatmul.mubr.f32.gmra.mrb[0].mxu0 %v229
        %v369 = vpop.f32.mrb[0].mxu0
        %v370 = vadd.f32 0.0, %v369
        %v371 = vpop.f32.mrb[0].mxu0
        %v372 = vadd.f32 0.0, %v371
        %373 = vmatprep.mubr.f32.mxu0 0.0
        %374 = vmatmul.mubr.f32.gmra.mrb[0].mxu0 %v232
        %v375 = vpop.f32.mrb[0].mxu0
        %v376 = vadd.f32 0.0, %v375
        %v377 = vpop.f32.mrb[0].mxu0
        %v378 = vadd.f32 0.0, %v377
        %379 = vmatprep.mubr.f32.mxu0 0.0
        %380 = vmatmul.mubr.f32.gmra.mrb[0].mxu0 %v235
        %v381 = vpop.f32.mrb[0].mxu0
        %v382 = vadd.f32 0.0, %v381
        %v383 = vpop.f32.mrb[0].mxu0
        %v384 = vadd.f32 0.0, %v383
        %385 = vmatprep.mubr.f32.mxu0 0.0
        %386 = vmatmul.mubr.f32.gmra.mrb[0].mxu0 %v238
        %v387 = vpop.f32.mrb[0].mxu0
        %v388 = vadd.f32 0.0, %v387
        %v389 = vpop.f32.mrb[0].mxu0
        %v390 = vadd.f32 0.0, %v389
        %391 = vmatprep.mubr.f32.mxu0 0.0
        %392 = vmatmul.mubr.f32.gmra.mrb[0].mxu0 %v241
        %v393 = vpop.f32.mrb[0].mxu0
        %v394 = vadd.f32 0.0, %v393
        %v395 = vpop.f32.mrb[0].mxu0
        %v396 = vadd.f32 0.0, %v395
        %397 = vmatprep.mubr.f32.mxu0 0.0
        %398 = vmatmul.mubr.f32.gmra.mrb[0].mxu0 %v244
        %v399 = vpop.f32.mrb[0].mxu0
        %v400 = vadd.f32 0.0, %v399
        %v401 = vpop.f32.mrb[0].mxu0
        %v402 = vadd.f32 0.0, %v401
        %403 = vmatprep.mubr.f32.mxu0 0.0
        %404 = vmatmul.mubr.f32.gmra.mrb[0].mxu0 %v247
        %v405 = vpop.f32.mrb[0].mxu0
        %v406 = vadd.f32 0.0, %v405
        %v407 = vpop.f32.mrb[0].mxu0
        %v408 = vadd.f32 0.0, %v407
        %409 = vdwg.mxu0
        %410 = vst [vmem:[%s167] sm:$0xff] %v316
        %411 = vst [vmem:[%s167 + $0x8] sm:$0xff] %v318
        %412 = vst [vmem:[%s167 + $0x10] sm:$0xff] %v322
        %413 = vst [vmem:[%s167 + $0x18] sm:$0xff] %v324
        %414 = vst [vmem:[%s167 + $0x20] sm:$0xff] %v328
        %415 = vst [vmem:[%s167 + $0x28] sm:$0xff] %v330
        %416 = vst [vmem:[%s167 + $0x30] sm:$0xff] %v334
        %417 = vst [vmem:[%s167 + $0x38] sm:$0xff] %v336
        %418 = vst [vmem:[%s167 + $0x40] sm:$0xff] %v340
        %419 = vst [vmem:[%s167 + $0x48] sm:$0xff] %v342
        %420 = vst [vmem:[%s167 + $0x50] sm:$0xff] %v346
        %421 = vst [vmem:[%s167 + $0x58] sm:$0xff] %v348
        %422 = vst [vmem:[%s167 + $0x60] sm:$0xff] %v352
        %423 = vst [vmem:[%s167 + $0x68] sm:$0xff] %v354
        %424 = vst [vmem:[%s167 + $0x70] sm:$0xff] %v358
        %425 = vst [vmem:[%s167 + $0x78] sm:$0xff] %v360
        %426 = vst [vmem:[%s167 + $0x80] sm:$0xff] %v364
        %427 = vst [vmem:[%s167 + $0x88] sm:$0xff] %v366
        %428 = vst [vmem:[%s167 + $0x90] sm:$0xff] %v370
        %429 = vst [vmem:[%s167 + $0x98] sm:$0xff] %v372
        %430 = vst [vmem:[%s167 + $0xa0] sm:$0xff] %v376
        %431 = vst [vmem:[%s167 + $0xa8] sm:$0xff] %v378
        %432 = vst [vmem:[%s167 + $0xb0] sm:$0xff] %v382
        %433 = vst [vmem:[%s167 + $0xb8] sm:$0xff] %v384
        %434 = vst [vmem:[%s167 + $0xc0] sm:$0xff] %v388
        %435 = vst [vmem:[%s167 + $0xc8] sm:$0xff] %v390
        %436 = vst [vmem:[%s167 + $0xd0] sm:$0xff] %v394
        %437 = vst [vmem:[%s167 + $0xd8] sm:$0xff] %v396
        %438 = vst [vmem:[%s167 + $0xe0] sm:$0xff] %v400
        %439 = vst [vmem:[%s167 + $0xe8] sm:$0xff] %v402
        %440 = vst [vmem:[%s167 + $0xf0] sm:$0xff] %v406
        %441 = vst [vmem:[%s167 + $0xf8] sm:$0xff] %v408
        %s442 = sand.u32 %s90, 1
        %s443 = scalar_lea.sflag [#allocation3], %s442
        %s444 = sand.u32 %s90, 1
        %s445 = smul.addr %s444, 256
        %s446 = scalar_lea.vmem [#allocation2], %s445
        // Predicated region
        $region29: #{tpu_custom_call.1} parent=27 // pred_check
          %p447 = pneg %p100
        $region30: #{tpu_custom_call.1} parent=27 // pred_check_branch
          %449 = sbr.rel (%p447) target = $region32
        $region31: #{tpu_custom_call.1} parent=27 // pred_region
          %s450 = smul.u32 16, %s20
          %s451 = smul.u32 2, %s21
          %s453 = ssub.s32 4096, 4096
          %454 = vsyncadd %s443, %s453
          %s455 = smul.addr %s450, 4
          %s456 = sadd.s32 %s451, %s455
          %s457 = smul.addr %s456, 128
          %s458 = scalar_lea.hbm %s2, %s457
          %s459 = sshll.u32 %s446, 4
          %s460 = int_to_ptr.vmem [resolvable:$true] %s459
          %465 = dma.vmem_to_hbm [thread:$0]  %s460, 4096, %s458, %s443, 256, 512, 16
        $region32: #{tpu_custom_call.1} parent=27 // pred_fallthru
          _
      $region28: #{tpu_custom_call.1} parent=5 // pred_fallthru
        _
      %p466 = scmp.le.s32.totalorder 2, %s11
      // Predicated region
      $region33: #{tpu_custom_call.1} parent=5 // pred_check
        %p467 = pneg %p466
      $region34: #{tpu_custom_call.1} parent=5 // pred_check_branch
        %469 = sbr.rel (%p467) target = $region36
      $region35: #{tpu_custom_call.1} parent=5 // pred_region
        %s470 = ssub.s32 %s11, 2
        // Predicated region
        $region37: #{tpu_custom_call.1} parent=35 // pred_check
          %p471 = pneg %p106
        $region38: #{tpu_custom_call.1} parent=35 // pred_check_branch
          %473 = sbr.rel (%p471) target = $region40
        $region39: #{tpu_custom_call.1} parent=35 // pred_region
          %s474 = sand.u32 %s91, 1
          %s475 = scalar_lea.sflag [#allocation3], %s474
          %s476 = sand.u32 %s91, 1
          %s477 = smul.addr %s476, 256
          %s478 = scalar_lea.vmem [#allocation2], %s477
          %479 = dma.done %s475, 4096
        $region40: #{tpu_custom_call.1} parent=35 // pred_fallthru
          _
      $region36: #{tpu_custom_call.1} parent=5 // pred_fallthru
        _
    $region6: #{tpu_custom_call.1} parent=1 // loop_footer
      %s15 = sadd.s32 1, %s11
    $region7: #{tpu_custom_call.1} parent=1 // loop_footer_branch
      %10 = sbr.rel target = $region3
    $region8: #{tpu_custom_call.1} parent=1 // loop_exit
      _
    %480 = vsyncpa [#allocation3], 1
    %s481 = scalar_lea.sflag [#allocation3], 1
    %482 = vsyncpa %s481, 1

</llo_original>
